<compile_context>
chip_gen: v7x
topology: tpu7x:2x2x1
jax: 0.10.0
libtpu: 0.0.40
codegen_flags: <defaults>
</compile_context>

<pallas_src>
import math

import jax
import jax.numpy as jnp
from jax import lax
from jax.experimental import pallas as pl
from jax.experimental.pallas import tpu as pltpu

# ----------------------------- config ---------------------------------------
B = 2            # batch
S = 8            # seq length (n_ctx)
D = 32           # d_model
H = 4            # n_heads
DH = 8           # d_head
D_MLP = 4 * D    # d_mlp = 128
QKV = 3 * H * DH
R = B * S        # folded rows = 16
EPS = 1e-5
LANES = 128
CONST_ROWS = 32  # 8 vector rows + 16 mask rows + 8 pad rows


# ----------------------------- kernel ---------------------------------------
def _transformer_block_kernel(
    x_ref,        # (R, D) f32
    consts_ref,   # (32, 128) f32: rows 0..7 = ln1_w, ln1_b, ln2_w, ln2_b, b_o,
                  #   b_out, b_in, b_qkv ; rows 8..23 cols 0..R = additive
                  #   block-diagonal causal mask ; rows 24..31 unused
    wqkv_ref,     # (D, 3*H*DH) bf16  (w_q pre-scaled by 1/sqrt(DH))
    wo_ref,       # (H*DH, D)   bf16
    win_ref,      # (D, D_MLP)  bf16
    wout_ref,     # (D_MLP, D)  bf16
    o_ref,        # (R, D) f32
):
    x = x_ref[...]                                       # (R, D) f32

    ln1_w = consts_ref[0:1, :D]
    ln1_b = consts_ref[1:2, :D]
    ln2_w = consts_ref[2:3, :D]
    ln2_b = consts_ref[3:4, :D]
    b_o = consts_ref[4:5, :D]
    b_out = consts_ref[5:6, :D]
    b_in = consts_ref[6:7, :D_MLP]
    b_qkv = consts_ref[7:8, :QKV]
    mask_add = consts_ref[8:8 + R, :R]                   # (R, R), 0 / -1e9

    def layernorm(v, w, b):                              # all f32
        mu = jnp.mean(v, axis=-1, keepdims=True)
        c = v - mu
        var = jnp.mean(c * c, axis=-1, keepdims=True)
        return c * lax.rsqrt(var + EPS) * w + b

    # ---- ln1 + attention ----------------------------------------------------
    ln1 = layernorm(x, ln1_w, ln1_b)                     # (R, D) f32

    # fused QKV projection (bf16 operands, f32 accumulation); scale pre-folded.
    qkv = jnp.dot(ln1.astype(jnp.bfloat16), wqkv_ref[...],
                  preferred_element_type=jnp.float32) + b_qkv   # (R, 3*H*DH) f32
    qkv_b = qkv.astype(jnp.bfloat16)                      # single cast, sliced below

    # per-head attention across ALL batches at once:
    # scores are (R, R) = (16,16) with a block-diagonal causal mask.
    heads = []
    for h in range(H):
        c0 = h * DH
        qh = qkv_b[:, c0:c0 + DH]                         # (R, DH) bf16
        kh = qkv_b[:, H * DH + c0:H * DH + c0 + DH]       # (R, DH) bf16
        vh = qkv_b[:, 2 * H * DH + c0:2 * H * DH + c0 + DH]
        # q @ k^T via contraction on last dims (MXU trans_b form), f32 acc
        s = lax.dot_general(qh, kh, (((1,), (1,)), ((), ())),
                            preferred_element_type=jnp.float32)  # (R, R) f32
        s = s + mask_add                                  # block-diag causal mask
        m = jnp.max(s, axis=-1, keepdims=True)
        e = jnp.exp(s - m)
        p = e * pl.reciprocal(jnp.sum(e, axis=-1, keepdims=True), approx=True)
        heads.append(jnp.dot(p.astype(jnp.bfloat16), vh,
                             preferred_element_type=jnp.float32))  # (R, DH) f32
    z = jnp.concatenate(heads, axis=1)                    # (R, H*DH) f32

    attn_out = jnp.dot(z.astype(jnp.bfloat16), wo_ref[...],
                       preferred_element_type=jnp.float32) + b_o
    resid_mid = attn_out + x                              # (R, D) f32

    # ---- ln2 + MLP ------------------------------------------------------------
    ln2 = layernorm(resid_mid, ln2_w, ln2_b)
    pre = jnp.dot(ln2.astype(jnp.bfloat16), win_ref[...],
                  preferred_element_type=jnp.float32) + b_in
    act = jax.nn.gelu(pre, approximate=True)              # tanh-GELU -> EUP
    mlp_out = jnp.dot(act.astype(jnp.bfloat16), wout_ref[...],
                      preferred_element_type=jnp.float32) + b_out

    o_ref[...] = mlp_out + resid_mid


# ----------------------------- wrapper ---------------------------------------
def _pack_consts(p):
    """Pack LN params, biases and the block-diag causal mask into (32,128) f32."""
    def row(v):
        v = jnp.asarray(v, jnp.float32).reshape(-1)
        return jnp.pad(v, (0, LANES - v.shape[0]))

    scale = 1.0 / math.sqrt(DH)
    b_qkv = jnp.concatenate(
        [p["b_q"].reshape(-1) * scale, p["b_k"].reshape(-1), p["b_v"].reshape(-1)])
    vec_rows = jnp.stack(
        [row(p["ln1_w"]), row(p["ln1_b"]),
         row(p["ln2_w"]), row(p["ln2_b"]),
         row(p["b_o"]), row(p["b_out"]),
         row(p["b_in"]), row(b_qkv)], axis=0)                     # (8, 128)

    # block-diagonal causal mask over (batch*seq, batch*seq)
    rows = jnp.arange(R)
    bi, si = rows // S, rows % S
    allowed = (bi[:, None] == bi[None, :]) & (si[None, :] <= si[:, None])
    mask = jnp.where(allowed, jnp.float32(0.0), jnp.float32(-1e9))   # (16, 16)
    mask = jnp.pad(mask, ((0, 0), (0, LANES - R)))                   # (16, 128)

    pad = jnp.zeros((CONST_ROWS - 8 - R, LANES), jnp.float32)        # (8, 128)
    return jnp.concatenate([vec_rows, mask, pad], axis=0)            # (32, 128)


def transformer_block(resid_pre, params):
    """resid_pre: (B, S, D) float32. params: dict of weights (see init)."""
    Bn, Sn, Dn = resid_pre.shape
    rows = Bn * Sn

    x2d = resid_pre.reshape(rows, Dn)                     # fold batch into rows
    scale = 1.0 / math.sqrt(DH)
    w_qkv = jnp.concatenate(
        [params["w_q"] * scale, params["w_k"], params["w_v"]],
        axis=1).astype(jnp.bfloat16)                      # bf16 weights for MXU
    w_o = params["w_o"].astype(jnp.bfloat16)
    w_in = params["w_in"].astype(jnp.bfloat16)
    w_out = params["w_out"].astype(jnp.bfloat16)
    consts = _pack_consts(params)

    def full2d(shape):
        return pl.BlockSpec(shape, lambda i: (0, 0))

    fn = pl.pallas_call(
        _transformer_block_kernel,
        out_shape=jax.ShapeDtypeStruct((rows, Dn), jnp.float32),
        grid=(1,),
        in_specs=[
            full2d((rows, Dn)),          # x (folded)
            full2d((CONST_ROWS, LANES)), # packed constants + mask
            full2d((Dn, QKV)),           # fused W_QKV (bf16, scaled q)
            full2d((H * DH, Dn)),        # W_O (bf16)
            full2d((Dn, D_MLP)),         # W_in (bf16)
            full2d((D_MLP, Dn)),         # W_out (bf16)
        ],
        out_specs=full2d((rows, Dn)),
        input_output_aliases={0: 0},     # output reuses x2d's HBM buffer
        compiler_params=pltpu.CompilerParams(
            dimension_semantics=("arbitrary",)),
    )
    out2d = fn(x2d, consts, w_qkv, w_o, w_in, w_out)
    return out2d.reshape(Bn, Sn, Dn)


# ------------------------ pure-JAX reference ----------------------------------
def transformer_block_ref(x, p):
    def layernorm(v, w, b):
        mu = jnp.mean(v, axis=-1, keepdims=True)
        c = v - mu
        var = jnp.mean(c * c, axis=-1, keepdims=True)
        return c * lax.rsqrt(var + EPS) * w + b

    ln1 = layernorm(x, p["ln1_w"][0], p["ln1_b"][0])
    q = (ln1 @ p["w_q"] + p["b_q"][0]).reshape(B, S, H, DH)
    k = (ln1 @ p["w_k"] + p["b_k"][0]).reshape(B, S, H, DH)
    v = (ln1 @ p["w_v"] + p["b_v"][0]).reshape(B, S, H, DH)
    scores = jnp.einsum('bqhd,bkhd->bhqk', q, k) / math.sqrt(DH)
    causal = jnp.tril(jnp.ones((S, S), bool))[None, None]
    scores = jnp.where(causal, scores, -1e9)
    probs = jax.nn.softmax(scores, axis=-1)
    z = jnp.einsum('bhqk,bkhd->bqhd', probs, v).reshape(B, S, H * DH)
    attn_out = z @ p["w_o"] + p["b_o"][0]
    resid_mid = attn_out + x
    ln2 = layernorm(resid_mid, p["ln2_w"][0], p["ln2_b"][0])
    act = jax.nn.gelu(ln2 @ p["w_in"] + p["b_in"][0], approximate=False)
    mlp_out = act @ p["w_out"] + p["b_out"][0]
    return mlp_out + resid_mid


# ------------------------------- main -----------------------------------------
def _init_params(key):
    ks = jax.random.split(key, 6)
    std = 0.02
    return {
        "ln1_w": jnp.ones((1, D), jnp.float32),
        "ln1_b": jnp.zeros((1, D), jnp.float32),
        "w_q": std * jax.random.normal(ks[0], (D, H * DH), jnp.float32),
        "b_q": jnp.zeros((1, H * DH), jnp.float32),
        "w_k": std * jax.random.normal(ks[1], (D, H * DH), jnp.float32),
        "b_k": jnp.zeros((1, H * DH), jnp.float32),
        "w_v": std * jax.random.normal(ks[2], (D, H * DH), jnp.float32),
        "b_v": jnp.zeros((1, H * DH), jnp.float32),
        "w_o": std * jax.random.normal(ks[3], (H * DH, D), jnp.float32),
        "b_o": jnp.zeros((1, D), jnp.float32),
        "ln2_w": jnp.ones((1, D), jnp.float32),
        "ln2_b": jnp.zeros((1, D), jnp.float32),
        "w_in": std * jax.random.normal(ks[4], (D, D_MLP), jnp.float32),
        "b_in": jnp.zeros((1, D_MLP), jnp.float32),
        "w_out": std * jax.random.normal(ks[5], (D_MLP, D), jnp.float32),
        "b_out": jnp.zeros((1, D), jnp.float32),
    }


if __name__ == "__main__":
    key = jax.random.PRNGKey(0)
    k_x, k_p = jax.random.split(key)
    resid_pre = jax.random.normal(k_x, (B, S, D), jnp.float32)
    params = _init_params(k_p)

    # reference first (resid_pre stays untouched by kernel-side buffer aliasing)
    ref = jax.block_until_ready(transformer_block_ref(resid_pre, params))

    out = transformer_block(resid_pre, params)
    out = jax.block_until_ready(out)

    assert out.shape == (B, S, D)
    assert bool(jnp.all(jnp.isfinite(out)))
    assert bool(jnp.allclose(out, ref, atol=2e-2, rtol=2e-2))
    print("KERNEL_OK")
</pallas_src>

<mosaic_0001>
module attributes {stable_mosaic.version = 11 : i64} {
  func.func @_transformer_block_kernel(%arg0: i32, %arg1: memref<16x32xf32, #tpu.memory_space<vmem>>, %arg2: memref<32x128xf32, #tpu.memory_space<vmem>>, %arg3: memref<32x96xbf16, #tpu.memory_space<vmem>>, %arg4: memref<32x32xbf16, #tpu.memory_space<vmem>>, %arg5: memref<32x128xbf16, #tpu.memory_space<vmem>>, %arg6: memref<128x32xbf16, #tpu.memory_space<vmem>>, %arg7: memref<16x32xf32, #tpu.memory_space<vmem>>) attributes {dimension_semantics = [#tpu.dimension_semantics<arbitrary>], iteration_bounds = array<i64: 1>, scalar_prefetch = 0 : i64, scratch_operands = 0 : i64, tpu.core_type = #tpu.core_type<tc>, window_params = [{pipeline_mode = #tpu.pipeline_mode<synchronous>, transform_indices = @transform_0, window_bounds = array<i64: 16, 32>}, {pipeline_mode = #tpu.pipeline_mode<synchronous>, transform_indices = @transform_1, window_bounds = array<i64: 32, 128>}, {pipeline_mode = #tpu.pipeline_mode<synchronous>, transform_indices = @transform_2, window_bounds = array<i64: 32, 96>}, {pipeline_mode = #tpu.pipeline_mode<synchronous>, transform_indices = @transform_3, window_bounds = array<i64: 32, 32>}, {pipeline_mode = #tpu.pipeline_mode<synchronous>, transform_indices = @transform_4, window_bounds = array<i64: 32, 128>}, {pipeline_mode = #tpu.pipeline_mode<synchronous>, transform_indices = @transform_5, window_bounds = array<i64: 128, 32>}, {pipeline_mode = #tpu.pipeline_mode<synchronous>, transform_indices = @transform_6, window_bounds = array<i64: 16, 32>}]} {
    %c0 = arith.constant 0 : index
    %c0_0 = arith.constant 0 : index
    %0 = vector.load %arg1[%c0, %c0_0] : memref<16x32xf32, #tpu.memory_space<vmem>>, vector<16x32xf32>
    %c0_1 = arith.constant 0 : index
    %c0_2 = arith.constant 0 : index
    %1 = vector.load %arg2[%c0_1, %c0_2] : memref<32x128xf32, #tpu.memory_space<vmem>>, vector<1x32xf32>
    %c1 = arith.constant 1 : index
    %c0_3 = arith.constant 0 : index
    %2 = vector.load %arg2[%c1, %c0_3] : memref<32x128xf32, #tpu.memory_space<vmem>>, vector<1x32xf32>
    %c2 = arith.constant 2 : index
    %c0_4 = arith.constant 0 : index
    %3 = vector.load %arg2[%c2, %c0_4] : memref<32x128xf32, #tpu.memory_space<vmem>>, vector<1x32xf32>
    %c3 = arith.constant 3 : index
    %c0_5 = arith.constant 0 : index
    %4 = vector.load %arg2[%c3, %c0_5] : memref<32x128xf32, #tpu.memory_space<vmem>>, vector<1x32xf32>
    %c4 = arith.constant 4 : index
    %c0_6 = arith.constant 0 : index
    %5 = vector.load %arg2[%c4, %c0_6] : memref<32x128xf32, #tpu.memory_space<vmem>>, vector<1x32xf32>
    %c5 = arith.constant 5 : index
    %c0_7 = arith.constant 0 : index
    %6 = vector.load %arg2[%c5, %c0_7] : memref<32x128xf32, #tpu.memory_space<vmem>>, vector<1x32xf32>
    %c6 = arith.constant 6 : index
    %c0_8 = arith.constant 0 : index
    %7 = vector.load %arg2[%c6, %c0_8] : memref<32x128xf32, #tpu.memory_space<vmem>>, vector<1x128xf32>
    %c7 = arith.constant 7 : index
    %c0_9 = arith.constant 0 : index
    %8 = vector.load %arg2[%c7, %c0_9] : memref<32x128xf32, #tpu.memory_space<vmem>>, vector<1x96xf32>
    %c8 = arith.constant 8 : index
    %c0_10 = arith.constant 0 : index
    %9 = vector.load %arg2[%c8, %c0_10] : memref<32x128xf32, #tpu.memory_space<vmem>>, vector<16x16xf32>
    %cst = arith.constant dense<0.000000e+00> : vector<16xf32>
    %10 = vector.multi_reduction <add>, %0, %cst [1] : vector<16x32xf32> to vector<16xf32>
    %11 = vector.shape_cast %10 : vector<16xf32> to vector<16x1xf32>
    %cst_11 = arith.constant 3.200000e+01 : f32
    %12 = vector.broadcast %cst_11 : f32 to vector<16x1xf32>
    %13 = arith.divf %11, %12 : vector<16x1xf32>
    %14 = vector.broadcast %13 : vector<16x1xf32> to vector<16x32xf32>
    %15 = arith.subf %0, %14 : vector<16x32xf32>
    %16 = arith.mulf %15, %15 : vector<16x32xf32>
    %cst_12 = arith.constant dense<0.000000e+00> : vector<16xf32>
    %17 = vector.multi_reduction <add>, %16, %cst_12 [1] : vector<16x32xf32> to vector<16xf32>
    %18 = vector.shape_cast %17 : vector<16xf32> to vector<16x1xf32>
    %cst_13 = arith.constant 3.200000e+01 : f32
    %19 = vector.broadcast %cst_13 : f32 to vector<16x1xf32>
    %20 = arith.divf %18, %19 : vector<16x1xf32>
    %cst_14 = arith.constant 9.99999974E-6 : f32
    %21 = vector.broadcast %cst_14 : f32 to vector<16x1xf32>
    %22 = arith.addf %20, %21 : vector<16x1xf32>
    %23 = math.rsqrt %22 : vector<16x1xf32>
    %24 = vector.broadcast %23 : vector<16x1xf32> to vector<16x32xf32>
    %25 = arith.mulf %15, %24 : vector<16x32xf32>
    %26 = vector.broadcast %1 : vector<1x32xf32> to vector<16x32xf32>
    %27 = arith.mulf %25, %26 : vector<16x32xf32>
    %28 = vector.broadcast %2 : vector<1x32xf32> to vector<16x32xf32>
    %29 = arith.addf %27, %28 : vector<16x32xf32>
    %30 = arith.truncf %29 : vector<16x32xf32> to vector<16x32xbf16>
    %c0_15 = arith.constant 0 : index
    %c0_16 = arith.constant 0 : index
    %31 = vector.load %arg3[%c0_15, %c0_16] : memref<32x96xbf16, #tpu.memory_space<vmem>>, vector<32x96xbf16>
    %cst_17 = arith.constant dense<0.000000e+00> : vector<16x96xf32>
    %32 = tpu.matmul %30, %31, %cst_17 {dimension_numbers = #tpu.dot_dimension_numbers<[1], [0], [0], [1], [0, 0, 1, 1], [], []>} : vector<16x32xbf16>, vector<32x96xbf16>, vector<16x96xf32> -> vector<16x96xf32>
    %33 = vector.broadcast %8 : vector<1x96xf32> to vector<16x96xf32>
    %34 = arith.addf %32, %33 : vector<16x96xf32>
    %35 = arith.truncf %34 : vector<16x96xf32> to vector<16x96xbf16>
    %36 = vector.extract_strided_slice %35 {offsets = [0, 0], sizes = [16, 8], strides = [1, 1]} : vector<16x96xbf16> to vector<16x8xbf16>
    %37 = vector.extract_strided_slice %35 {offsets = [0, 32], sizes = [16, 8], strides = [1, 1]} : vector<16x96xbf16> to vector<16x8xbf16>
    %38 = vector.extract_strided_slice %35 {offsets = [0, 64], sizes = [16, 8], strides = [1, 1]} : vector<16x96xbf16> to vector<16x8xbf16>
    %cst_18 = arith.constant dense<0.000000e+00> : vector<16x16xf32>
    %39 = tpu.matmul %36, %37, %cst_18 {dimension_numbers = #tpu.dot_dimension_numbers<[1], [1], [0], [0], [0, 0, 1, 0], [], []>} : vector<16x8xbf16>, vector<16x8xbf16>, vector<16x16xf32> -> vector<16x16xf32>
    %40 = arith.addf %39, %9 : vector<16x16xf32>
    %cst_19 = arith.constant dense<0xFF800000> : vector<16xf32>
    %41 = vector.multi_reduction <maximumf>, %40, %cst_19 [1] : vector<16x16xf32> to vector<16xf32>
    %42 = vector.shape_cast %41 : vector<16xf32> to vector<16x1xf32>
    %43 = vector.broadcast %42 : vector<16x1xf32> to vector<16x16xf32>
    %44 = arith.subf %40, %43 : vector<16x16xf32>
    %45 = math.exp %44 : vector<16x16xf32>
    %cst_20 = arith.constant dense<0.000000e+00> : vector<16xf32>
    %46 = vector.multi_reduction <add>, %45, %cst_20 [1] : vector<16x16xf32> to vector<16xf32>
    %47 = vector.shape_cast %46 : vector<16xf32> to vector<16x1xf32>
    %48 = tpu.reciprocal %47 {approx = true} : vector<16x1xf32> -> vector<16x1xf32>
    %49 = vector.broadcast %48 : vector<16x1xf32> to vector<16x16xf32>
    %50 = arith.mulf %45, %49 : vector<16x16xf32>
    %51 = arith.truncf %50 : vector<16x16xf32> to vector<16x16xbf16>
    %cst_21 = arith.constant dense<0.000000e+00> : vector<16x8xf32>
    %52 = tpu.matmul %51, %38, %cst_21 {dimension_numbers = #tpu.dot_dimension_numbers<[1], [0], [0], [1], [0, 0, 1, 1], [], []>} : vector<16x16xbf16>, vector<16x8xbf16>, vector<16x8xf32> -> vector<16x8xf32>
    %53 = vector.extract_strided_slice %35 {offsets = [0, 8], sizes = [16, 8], strides = [1, 1]} : vector<16x96xbf16> to vector<16x8xbf16>
    %54 = vector.extract_strided_slice %35 {offsets = [0, 40], sizes = [16, 8], strides = [1, 1]} : vector<16x96xbf16> to vector<16x8xbf16>
    %55 = vector.extract_strided_slice %35 {offsets = [0, 72], sizes = [16, 8], strides = [1, 1]} : vector<16x96xbf16> to vector<16x8xbf16>
    %cst_22 = arith.constant dense<0.000000e+00> : vector<16x16xf32>
    %56 = tpu.matmul %53, %54, %cst_22 {dimension_numbers = #tpu.dot_dimension_numbers<[1], [1], [0], [0], [0, 0, 1, 0], [], []>} : vector<16x8xbf16>, vector<16x8xbf16>, vector<16x16xf32> -> vector<16x16xf32>
    %57 = arith.addf %56, %9 : vector<16x16xf32>
    %cst_23 = arith.constant dense<0xFF800000> : vector<16xf32>
    %58 = vector.multi_reduction <maximumf>, %57, %cst_23 [1] : vector<16x16xf32> to vector<16xf32>
    %59 = vector.shape_cast %58 : vector<16xf32> to vector<16x1xf32>
    %60 = vector.broadcast %59 : vector<16x1xf32> to vector<16x16xf32>
    %61 = arith.subf %57, %60 : vector<16x16xf32>
    %62 = math.exp %61 : vector<16x16xf32>
    %cst_24 = arith.constant dense<0.000000e+00> : vector<16xf32>
    %63 = vector.multi_reduction <add>, %62, %cst_24 [1] : vector<16x16xf32> to vector<16xf32>
    %64 = vector.shape_cast %63 : vector<16xf32> to vector<16x1xf32>
    %65 = tpu.reciprocal %64 {approx = true} : vector<16x1xf32> -> vector<16x1xf32>
    %66 = vector.broadcast %65 : vector<16x1xf32> to vector<16x16xf32>
    %67 = arith.mulf %62, %66 : vector<16x16xf32>
    %68 = arith.truncf %67 : vector<16x16xf32> to vector<16x16xbf16>
    %cst_25 = arith.constant dense<0.000000e+00> : vector<16x8xf32>
    %69 = tpu.matmul %68, %55, %cst_25 {dimension_numbers = #tpu.dot_dimension_numbers<[1], [0], [0], [1], [0, 0, 1, 1], [], []>} : vector<16x16xbf16>, vector<16x8xbf16>, vector<16x8xf32> -> vector<16x8xf32>
    %70 = vector.extract_strided_slice %35 {offsets = [0, 16], sizes = [16, 8], strides = [1, 1]} : vector<16x96xbf16> to vector<16x8xbf16>
    %71 = vector.extract_strided_slice %35 {offsets = [0, 48], sizes = [16, 8], strides = [1, 1]} : vector<16x96xbf16> to vector<16x8xbf16>
    %72 = vector.extract_strided_slice %35 {offsets = [0, 80], sizes = [16, 8], strides = [1, 1]} : vector<16x96xbf16> to vector<16x8xbf16>
    %cst_26 = arith.constant dense<0.000000e+00> : vector<16x16xf32>
    %73 = tpu.matmul %70, %71, %cst_26 {dimension_numbers = #tpu.dot_dimension_numbers<[1], [1], [0], [0], [0, 0, 1, 0], [], []>} : vector<16x8xbf16>, vector<16x8xbf16>, vector<16x16xf32> -> vector<16x16xf32>
    %74 = arith.addf %73, %9 : vector<16x16xf32>
    %cst_27 = arith.constant dense<0xFF800000> : vector<16xf32>
    %75 = vector.multi_reduction <maximumf>, %74, %cst_27 [1] : vector<16x16xf32> to vector<16xf32>
    %76 = vector.shape_cast %75 : vector<16xf32> to vector<16x1xf32>
    %77 = vector.broadcast %76 : vector<16x1xf32> to vector<16x16xf32>
    %78 = arith.subf %74, %77 : vector<16x16xf32>
    %79 = math.exp %78 : vector<16x16xf32>
    %cst_28 = arith.constant dense<0.000000e+00> : vector<16xf32>
    %80 = vector.multi_reduction <add>, %79, %cst_28 [1] : vector<16x16xf32> to vector<16xf32>
    %81 = vector.shape_cast %80 : vector<16xf32> to vector<16x1xf32>
    %82 = tpu.reciprocal %81 {approx = true} : vector<16x1xf32> -> vector<16x1xf32>
    %83 = vector.broadcast %82 : vector<16x1xf32> to vector<16x16xf32>
    %84 = arith.mulf %79, %83 : vector<16x16xf32>
    %85 = arith.truncf %84 : vector<16x16xf32> to vector<16x16xbf16>
    %cst_29 = arith.constant dense<0.000000e+00> : vector<16x8xf32>
    %86 = tpu.matmul %85, %72, %cst_29 {dimension_numbers = #tpu.dot_dimension_numbers<[1], [0], [0], [1], [0, 0, 1, 1], [], []>} : vector<16x16xbf16>, vector<16x8xbf16>, vector<16x8xf32> -> vector<16x8xf32>
    %87 = vector.extract_strided_slice %35 {offsets = [0, 24], sizes = [16, 8], strides = [1, 1]} : vector<16x96xbf16> to vector<16x8xbf16>
    %88 = vector.extract_strided_slice %35 {offsets = [0, 56], sizes = [16, 8], strides = [1, 1]} : vector<16x96xbf16> to vector<16x8xbf16>
    %89 = vector.extract_strided_slice %35 {offsets = [0, 88], sizes = [16, 8], strides = [1, 1]} : vector<16x96xbf16> to vector<16x8xbf16>
    %cst_30 = arith.constant dense<0.000000e+00> : vector<16x16xf32>
    %90 = tpu.matmul %87, %88, %cst_30 {dimension_numbers = #tpu.dot_dimension_numbers<[1], [1], [0], [0], [0, 0, 1, 0], [], []>} : vector<16x8xbf16>, vector<16x8xbf16>, vector<16x16xf32> -> vector<16x16xf32>
    %91 = arith.addf %90, %9 : vector<16x16xf32>
    %cst_31 = arith.constant dense<0xFF800000> : vector<16xf32>
    %92 = vector.multi_reduction <maximumf>, %91, %cst_31 [1] : vector<16x16xf32> to vector<16xf32>
    %93 = vector.shape_cast %92 : vector<16xf32> to vector<16x1xf32>
    %94 = vector.broadcast %93 : vector<16x1xf32> to vector<16x16xf32>
    %95 = arith.subf %91, %94 : vector<16x16xf32>
    %96 = math.exp %95 : vector<16x16xf32>
    %cst_32 = arith.constant dense<0.000000e+00> : vector<16xf32>
    %97 = vector.multi_reduction <add>, %96, %cst_32 [1] : vector<16x16xf32> to vector<16xf32>
    %98 = vector.shape_cast %97 : vector<16xf32> to vector<16x1xf32>
    %99 = tpu.reciprocal %98 {approx = true} : vector<16x1xf32> -> vector<16x1xf32>
    %100 = vector.broadcast %99 : vector<16x1xf32> to vector<16x16xf32>
    %101 = arith.mulf %96, %100 : vector<16x16xf32>
    %102 = arith.truncf %101 : vector<16x16xf32> to vector<16x16xbf16>
    %cst_33 = arith.constant dense<0.000000e+00> : vector<16x8xf32>
    %103 = tpu.matmul %102, %89, %cst_33 {dimension_numbers = #tpu.dot_dimension_numbers<[1], [0], [0], [1], [0, 0, 1, 1], [], []>} : vector<16x16xbf16>, vector<16x8xbf16>, vector<16x8xf32> -> vector<16x8xf32>
    %104 = tpu.concatenate %52, %69, %86, %103 in 1 : vector<16x8xf32>, vector<16x8xf32>, vector<16x8xf32>, vector<16x8xf32> -> vector<16x32xf32>
    %105 = arith.truncf %104 : vector<16x32xf32> to vector<16x32xbf16>
    %c0_34 = arith.constant 0 : index
    %c0_35 = arith.constant 0 : index
    %106 = vector.load %arg4[%c0_34, %c0_35] : memref<32x32xbf16, #tpu.memory_space<vmem>>, vector<32x32xbf16>
    %cst_36 = arith.constant dense<0.000000e+00> : vector<16x32xf32>
    %107 = tpu.matmul %105, %106, %cst_36 {dimension_numbers = #tpu.dot_dimension_numbers<[1], [0], [0], [1], [0, 0, 1, 1], [], []>} : vector<16x32xbf16>, vector<32x32xbf16>, vector<16x32xf32> -> vector<16x32xf32>
    %108 = vector.broadcast %5 : vector<1x32xf32> to vector<16x32xf32>
    %109 = arith.addf %107, %108 : vector<16x32xf32>
    %110 = arith.addf %109, %0 : vector<16x32xf32>
    %cst_37 = arith.constant dense<0.000000e+00> : vector<16xf32>
    %111 = vector.multi_reduction <add>, %110, %cst_37 [1] : vector<16x32xf32> to vector<16xf32>
    %112 = vector.shape_cast %111 : vector<16xf32> to vector<16x1xf32>
    %cst_38 = arith.constant 3.200000e+01 : f32
    %113 = vector.broadcast %cst_38 : f32 to vector<16x1xf32>
    %114 = arith.divf %112, %113 : vector<16x1xf32>
    %115 = vector.broadcast %114 : vector<16x1xf32> to vector<16x32xf32>
    %116 = arith.subf %110, %115 : vector<16x32xf32>
    %117 = arith.mulf %116, %116 : vector<16x32xf32>
    %cst_39 = arith.constant dense<0.000000e+00> : vector<16xf32>
    %118 = vector.multi_reduction <add>, %117, %cst_39 [1] : vector<16x32xf32> to vector<16xf32>
    %119 = vector.shape_cast %118 : vector<16xf32> to vector<16x1xf32>
    %cst_40 = arith.constant 3.200000e+01 : f32
    %120 = vector.broadcast %cst_40 : f32 to vector<16x1xf32>
    %121 = arith.divf %119, %120 : vector<16x1xf32>
    %cst_41 = arith.constant 9.99999974E-6 : f32
    %122 = vector.broadcast %cst_41 : f32 to vector<16x1xf32>
    %123 = arith.addf %121, %122 : vector<16x1xf32>
    %124 = math.rsqrt %123 : vector<16x1xf32>
    %125 = vector.broadcast %124 : vector<16x1xf32> to vector<16x32xf32>
    %126 = arith.mulf %116, %125 : vector<16x32xf32>
    %127 = vector.broadcast %3 : vector<1x32xf32> to vector<16x32xf32>
    %128 = arith.mulf %126, %127 : vector<16x32xf32>
    %129 = vector.broadcast %4 : vector<1x32xf32> to vector<16x32xf32>
    %130 = arith.addf %128, %129 : vector<16x32xf32>
    %131 = arith.truncf %130 : vector<16x32xf32> to vector<16x32xbf16>
    %c0_42 = arith.constant 0 : index
    %c0_43 = arith.constant 0 : index
    %132 = vector.load %arg5[%c0_42, %c0_43] : memref<32x128xbf16, #tpu.memory_space<vmem>>, vector<32x128xbf16>
    %cst_44 = arith.constant dense<0.000000e+00> : vector<16x128xf32>
    %133 = tpu.matmul %131, %132, %cst_44 {dimension_numbers = #tpu.dot_dimension_numbers<[1], [0], [0], [1], [0, 0, 1, 1], [], []>} : vector<16x32xbf16>, vector<32x128xbf16>, vector<16x128xf32> -> vector<16x128xf32>
    %134 = vector.broadcast %7 : vector<1x128xf32> to vector<16x128xf32>
    %135 = arith.addf %133, %134 : vector<16x128xf32>
    %136 = arith.mulf %135, %135 : vector<16x128xf32>
    %137 = arith.mulf %135, %136 : vector<16x128xf32>
    %cst_45 = arith.constant 4.471500e-02 : f32
    %138 = vector.broadcast %cst_45 : f32 to vector<16x128xf32>
    %139 = arith.mulf %138, %137 : vector<16x128xf32>
    %140 = arith.addf %135, %139 : vector<16x128xf32>
    %cst_46 = arith.constant 0.797884583 : f32
    %141 = vector.broadcast %cst_46 : f32 to vector<16x128xf32>
    %142 = arith.mulf %141, %140 : vector<16x128xf32>
    %143 = math.tanh %142 : vector<16x128xf32>
    %cst_47 = arith.constant 1.000000e+00 : f32
    %144 = vector.broadcast %cst_47 : f32 to vector<16x128xf32>
    %145 = arith.addf %144, %143 : vector<16x128xf32>
    %cst_48 = arith.constant 5.000000e-01 : f32
    %146 = vector.broadcast %cst_48 : f32 to vector<16x128xf32>
    %147 = arith.mulf %146, %145 : vector<16x128xf32>
    %148 = arith.mulf %135, %147 : vector<16x128xf32>
    %149 = arith.truncf %148 : vector<16x128xf32> to vector<16x128xbf16>
    %c0_49 = arith.constant 0 : index
    %c0_50 = arith.constant 0 : index
    %150 = vector.load %arg6[%c0_49, %c0_50] : memref<128x32xbf16, #tpu.memory_space<vmem>>, vector<128x32xbf16>
    %cst_51 = arith.constant dense<0.000000e+00> : vector<16x32xf32>
    %151 = tpu.matmul %149, %150, %cst_51 {dimension_numbers = #tpu.dot_dimension_numbers<[1], [0], [0], [1], [0, 0, 1, 1], [], []>} : vector<16x128xbf16>, vector<128x32xbf16>, vector<16x32xf32> -> vector<16x32xf32>
    %152 = vector.broadcast %6 : vector<1x32xf32> to vector<16x32xf32>
    %153 = arith.addf %151, %152 : vector<16x32xf32>
    %154 = arith.addf %153, %110 : vector<16x32xf32>
    %c0_52 = arith.constant 0 : index
    %c0_53 = arith.constant 0 : index
    %155 = vector.load %arg7[%c0_52, %c0_53] : memref<16x32xf32, #tpu.memory_space<vmem>>, vector<16x32xf32>
    tpu.vector_store %arg7[%c0_52, %c0_53], %154 {strides = array<i32>} : memref<16x32xf32, #tpu.memory_space<vmem>>, vector<16x32xf32>,
    return
  }
  func.func @transform_0(%arg0: i32) -> (i32, i32) {
    %c0_i32 = arith.constant 0 : i32
    %c0_i32_0 = arith.constant 0 : i32
    %c0_i32_1 = arith.constant 0 : i32
    return %c0_i32, %c0_i32_0 : i32, i32
  }
  func.func @transform_1(%arg0: i32) -> (i32, i32) {
    %c0_i32 = arith.constant 0 : i32
    %c0_i32_0 = arith.constant 0 : i32
    %c0_i32_1 = arith.constant 0 : i32
    return %c0_i32, %c0_i32_0 : i32, i32
  }
  func.func @transform_2(%arg0: i32) -> (i32, i32) {
    %c0_i32 = arith.constant 0 : i32
    %c0_i32_0 = arith.constant 0 : i32
    %c0_i32_1 = arith.constant 0 : i32
    return %c0_i32, %c0_i32_0 : i32, i32
  }
  func.func @transform_3(%arg0: i32) -> (i32, i32) {
    %c0_i32 = arith.constant 0 : i32
    %c0_i32_0 = arith.constant 0 : i32
    %c0_i32_1 = arith.constant 0 : i32
    return %c0_i32, %c0_i32_0 : i32, i32
  }
  func.func @transform_4(%arg0: i32) -> (i32, i32) {
    %c0_i32 = arith.constant 0 : i32
    %c0_i32_0 = arith.constant 0 : i32
    %c0_i32_1 = arith.constant 0 : i32
    return %c0_i32, %c0_i32_0 : i32, i32
  }
  func.func @transform_5(%arg0: i32) -> (i32, i32) {
    %c0_i32 = arith.constant 0 : i32
    %c0_i32_0 = arith.constant 0 : i32
    %c0_i32_1 = arith.constant 0 : i32
    return %c0_i32, %c0_i32_0 : i32, i32
  }
  func.func @transform_6(%arg0: i32) -> (i32, i32) {
    %c0_i32 = arith.constant 0 : i32
    %c0_i32_0 = arith.constant 0 : i32
    %c0_i32_1 = arith.constant 0 : i32
    return %c0_i32, %c0_i32_0 : i32, i32
  }
}

</mosaic_0001>

<llo_original>
// kernel: tpu_custom_call.1
$region0: #{tpu_custom_call.1}
  #allocation0 [shape = 'u32[]', space=smem, size = 0x4, offset = 0x4, fixed_abs, tag = 'smem constant byte address 0x4 - core index']
  #allocation1 [shape = 'u32[144,128]{1,0:T(1,128)}', space=vmem, size = 0x12000, scoped, tag = 'internal scratch']
  %s0 = inlined_call_operand.hbm [shape: f32[16,32], index: 0, kind: input, shape index: {}, may-alias: {0,6}]
  %s1 = inlined_call_operand.vmem [shape: f32[32,128], index: 1, kind: input, shape index: {}]
  %s2 = inlined_call_operand.vmem [shape: bf16[32,96], index: 2, kind: input, shape index: {}]
  %s3 = inlined_call_operand.vmem [shape: bf16[32,32], index: 3, kind: input, shape index: {}]
  %s4 = inlined_call_operand.vmem [shape: bf16[32,128], index: 4, kind: input, shape index: {}]
  %s5 = inlined_call_operand.vmem [shape: bf16[128,32], index: 5, kind: input, shape index: {}]
  %s6 = inlined_call_operand.hbm [shape: f32[16,32], index: 6, kind: output, shape index: {}, may-alias: {0,6}]
  %s7 = sld [smem:[#allocation0]]
  $region38: #{tpu_custom_call.1} parent=0
    _
  %s9 = ssub.s32 1, %s7
  %s10 = scalar_select 0, %s9, %s7
  $region1: #{tpu_custom_call.1} parent=0
    #allocation2 [shape = 'u8[8192]{0}', space=vmem, size = 0x2000, scoped, tag = 'input window, operand 0, single buffered']
    #allocation3 [shape = 's32[1]{0}', space=sflag, size = 0x4, scoped, tag = 'scoped memory for tpu_custom_call.1']
    #allocation4 [shape = 's32[1]{0}', space=sflag, size = 0x4, scoped, tag = 'scoped memory for tpu_custom_call.1']
    #allocation5 [shape = 'u8[8192]{0}', space=vmem, size = 0x2000, scoped, tag = 'output window, operand 0, single buffered']
    %11 = vsyncpa [#allocation3], 0
    %12 = vsyncpa [#allocation4], 0
    // Predicated region
    $region2: #{tpu_custom_call.1} parent=1 // pred_check
      _
    $region3: #{tpu_custom_call.1} parent=1 // pred_check_branch
      %14 = sbr.rel (0) target = $region5
    $region4: #{tpu_custom_call.1} parent=1 // pred_region
      %s16 = ssub.s32 256, 256
      %17 = vsyncadd [#allocation3], %s16
      %s18 = sshll.u32 [#allocation2], 4
      %s19 = int_to_ptr.vmem [resolvable:$true] %s18
      %24 = dma.hbm_to_vmem [thread:$0]  %s0, 256, %s19, [#allocation3], 128, 128, 8
    $region5: #{tpu_custom_call.1} parent=1 // pred_fallthru
      _
    // Predicated region
    $region6: #{tpu_custom_call.1} parent=1 // pred_check
      _
    $region7: #{tpu_custom_call.1} parent=1 // pred_check_branch
      %26 = sbr.rel (0) target = $region9
    $region8: #{tpu_custom_call.1} parent=1 // pred_region
      _
    $region9: #{tpu_custom_call.1} parent=1 // pred_fallthru
      _
    // Predicated region
    $region10: #{tpu_custom_call.1} parent=1 // pred_check
      _
    $region11: #{tpu_custom_call.1} parent=1 // pred_check_branch
      %28 = sbr.rel (0) target = $region13
    $region12: #{tpu_custom_call.1} parent=1 // pred_region
      _
    $region13: #{tpu_custom_call.1} parent=1 // pred_fallthru
      _
    // Predicated region
    $region14: #{tpu_custom_call.1} parent=1 // pred_check
      _
    $region15: #{tpu_custom_call.1} parent=1 // pred_check_branch
      %30 = sbr.rel (0) target = $region17
    $region16: #{tpu_custom_call.1} parent=1 // pred_region
      _
    $region17: #{tpu_custom_call.1} parent=1 // pred_fallthru
      _
    // Predicated region
    $region18: #{tpu_custom_call.1} parent=1 // pred_check
      _
    $region19: #{tpu_custom_call.1} parent=1 // pred_check_branch
      %32 = sbr.rel (0) target = $region21
    $region20: #{tpu_custom_call.1} parent=1 // pred_region
      _
    $region21: #{tpu_custom_call.1} parent=1 // pred_fallthru
      _
    // Predicated region
    $region22: #{tpu_custom_call.1} parent=1 // pred_check
      _
    $region23: #{tpu_custom_call.1} parent=1 // pred_check_branch
      %34 = sbr.rel (0) target = $region25
    $region24: #{tpu_custom_call.1} parent=1 // pred_region
      _
    $region25: #{tpu_custom_call.1} parent=1 // pred_fallthru
      _
    // Predicated region
    $region26: #{tpu_custom_call.1} parent=1 // pred_check
      _
    $region27: #{tpu_custom_call.1} parent=1 // pred_check_branch
      %36 = sbr.rel (0) target = $region29
    $region28: #{tpu_custom_call.1} parent=1 // pred_region
      %37 = dma.done [#allocation3], 256
    $region29: #{tpu_custom_call.1} parent=1 // pred_fallthru
      _
    %v39 = vld [vmem:[#allocation2] sm:$0xff]
    %v40 = vld [vmem:[#allocation2 + $0x8] sm:$0xff]
    %v41 = vld [vmem:[%s1] sm:$0x1]
    %v42 = vld [vmem:[%s1 + $0x1] sm:$0x1]
    %v43 = vld [vmem:[%s1 + $0x2] sm:$0x1]
    %v44 = vld [vmem:[%s1 + $0x3] sm:$0x1]
    %v45 = vld [vmem:[%s1 + $0x4] sm:$0x1]
    %v46 = vld [vmem:[%s1 + $0x5] sm:$0x1]
    %v47 = vld [vmem:[%s1 + $0x6] sm:$0x1]
    %v48 = vld [vmem:[%s1 + $0x7] sm:$0x1]
    %v49 = vld [vmem:[%s1 + $0x8] sm:$0xff]
    %v50 = vld [vmem:[%s1 + $0x10] sm:$0xff]
    %vm51 = vcmask 261120
    %v52 = vsel %vm51, %v39, 0.0
    %53 = vadd.xlane.f32.xlu0 %v52
    %v54 = vpop.xlane.xlu0 %53
    %v55 = vsel %vm51, %v40, 0.0
    %56 = vadd.xlane.f32.xlu0 %v55
    %v57 = vpop.xlane.xlu0 %56
    %v58 = vrcp.pop 32.0
    %v59 = vmul.f32 %v54, %v58
    %v60 = vmul.f32 %v57, %v58
    %v61 = vsub.f32 %v39, %v59
    %v62 = vsub.f32 %v40, %v60
    %v63 = vmul.f32 %v61, %v61
    %v64 = vmul.f32 %v62, %v62
    %v65 = vsel %vm51, %v63, 0.0
    %66 = vadd.xlane.f32.xlu0 %v65
    %v67 = vpop.xlane.xlu0 %66
    %v68 = vsel %vm51, %v64, 0.0
    %69 = vadd.xlane.f32.xlu0 %v68
    %v70 = vpop.xlane.xlu0 %69
    %v71 = vmul.f32 %v67, %v58
    %v72 = vmul.f32 %v70, %v58
    %v73 = vadd.f32 %v71, 1e-05
    %v74 = vadd.f32 %v72, 1e-05
    %v75 = vrsqrt.pop %v73
    %v76 = vrsqrt.pop %v74
    %v77 = vmul.f32 %v61, %v75
    %v78 = vmul.f32 %v62, %v76
    %v79 = vlaneseq
    %v80 = vshrl.u32 %v79, 7
    %v81 = vsub.s32 0, %v80
    %v82 = vrot.slane %v41, %v81
    %v83 = vmul.f32 %v77, %v82
    %v84 = vmul.f32 %v78, %v82
    %v85 = vlaneseq
    %v86 = vshrl.u32 %v85, 7
    %v87 = vsub.s32 0, %v86
    %v88 = vrot.slane %v42, %v87
    %v89 = vadd.f32 %v83, %v88
    %v90 = vadd.f32 %v84, %v88
    %v91 = vpack.c.bf16 %v90, %v89
    %v92 = vld [vmem:[%s2] sm:$0xf]
    %v93 = vld [vmem:[%s2 + $0x4] sm:$0xf]
    %v94 = vld [vmem:[%s2 + $0x8] sm:$0xf]
    %v95 = vld [vmem:[%s2 + $0xc] sm:$0xf]
    %v96 = vlaneseq
    %v97 = vshrl.u32 %v96, 7
    %v98 = vsub.s32 0, %v97
    %v99 = vrot.slane %v48, %v98
    %v104 = vunpack.c.l.b16 %v92
    %v105 = vunpack.c.l.b16 %v93
    %v106 = vunpack.c.l.b16 %v94
    %v107 = vunpack.c.l.b16 %v95
    %v108 = vpack.c.b16 %v105, %v104
    %v109 = vpack.c.b16 %v107, %v106
    %v113 = vsel %vm51, %v91, 0
    %115 = vmatprep.subr.bf16.mxu0 0
    %116 = vmatpush1.bf16.msra.mxu0 %v108
    %117 = vmatprep.subr.bf16.mxu0 0
    %118 = vmatpush1.bf16.msra.mxu0 %v109
    %119 = vmatprep.subr.bf16.mxu0 0
    %120 = vmatpush1.bf16.msra.mxu0 0
    %121 = vmatprep.subr.bf16.mxu0 0
    %122 = vmatpush1.bf16.msra.mxu0 0
    %123 = vmatprep.subr.bf16.mxu0 0
    %124 = vmatpush1.bf16.msra.mxu0 0
    %125 = vmatprep.subr.bf16.mxu0 0
    %126 = vmatpush1.bf16.msra.mxu0 0
    %127 = vmatprep.subr.bf16.mxu0 0
    %128 = vmatpush1.bf16.msra.mxu0 0
    %129 = vmatprep.subr.bf16.mxu0 0
    %130 = vmatpush1.bf16.msra.mxu0 0
    %131 = vmatprep.subr.bf16.mxu0 0
    %132 = vmatpush1.bf16.msra.mxu0 0
    %133 = vmatprep.subr.bf16.mxu0 0
    %134 = vmatpush1.bf16.msra.mxu0 0
    %135 = vmatprep.subr.bf16.mxu0 0
    %136 = vmatpush1.bf16.msra.mxu0 0
    %137 = vmatprep.subr.bf16.mxu0 0
    %138 = vmatpush1.bf16.msra.mxu0 0
    %139 = vmatprep.subr.bf16.mxu0 0
    %140 = vmatpush1.bf16.msra.mxu0 0
    %141 = vmatprep.subr.bf16.mxu0 0
    %142 = vmatpush1.bf16.msra.mxu0 0
    %143 = vmatprep.subr.bf16.mxu0 0
    %144 = vmatpush1.bf16.msra.mxu0 0
    %145 = vmatprep.subr.bf16.mxu0 0
    %146 = vmatpush1.bf16.msra.mxu0 0
    %147 = vmatprep.mubr.bf16.mxu0 0
    %148 = vmatmul.mubr.bf16.gmra.mrb[0].mxu0 %v113
    %v149 = vpop.f32.mrb[0].mxu0
    %v150 = vadd.f32 %v99, %v149
    %v151 = vpop.f32.mrb[0].mxu0
    %v152 = vpop.f32.mrb[0].mxu0
    %v153 = vadd.f32 %v99, %v152
    %v154 = vpop.f32.mrb[0].mxu0
    %155 = vdwg.mxu0
    %v156 = vpack.c.bf16 %v153, %v150
    %158 = vrot.lane.b32.xlu0 %v156, 96
    %v159 = vpop.permute.xlu0 %158
    %vm160 = vcmask 64512
    %v162 = vsel %vm160, %v156, 0
    %v165 = vsel %vm160, %v159, 0
    %167 = vmatprep.subr.bf16.mxu0 0
    %168 = vmatpush1.bf16.xpose.msra.mxu0 %v165
    %169 = vmatprep.subr.bf16.mxu0 0
    %170 = vmatpush1.bf16.xpose.msra.mxu0 0
    %171 = vmatprep.subr.bf16.mxu0 0
    %172 = vmatpush1.bf16.xpose.msra.mxu0 0
    %173 = vmatprep.subr.bf16.mxu0 0
    %174 = vmatpush1.bf16.xpose.msra.mxu0 0
    %175 = vmatprep.subr.bf16.mxu0 0
    %176 = vmatpush1.bf16.xpose.msra.mxu0 0
    %177 = vmatprep.subr.bf16.mxu0 0
    %178 = vmatpush1.bf16.xpose.msra.mxu0 0
    %179 = vmatprep.subr.bf16.mxu0 0
    %180 = vmatpush1.bf16.xpose.msra.mxu0 0
    %181 = vmatprep.subr.bf16.mxu0 0
    %182 = vmatpush1.bf16.xpose.msra.mxu0 0
    %183 = vmatprep.subr.bf16.mxu0 0
    %184 = vmatpush1.bf16.xpose.msra.mxu0 0
    %185 = vmatprep.subr.bf16.mxu0 0
    %186 = vmatpush1.bf16.xpose.msra.mxu0 0
    %187 = vmatprep.subr.bf16.mxu0 0
    %188 = vmatpush1.bf16.xpose.msra.mxu0 0
    %189 = vmatprep.subr.bf16.mxu0 0
    %190 = vmatpush1.bf16.xpose.msra.mxu0 0
    %191 = vmatprep.subr.bf16.mxu0 0
    %192 = vmatpush1.bf16.xpose.msra.mxu0 0
    %193 = vmatprep.subr.bf16.mxu0 0
    %194 = vmatpush1.bf16.xpose.msra.mxu0 0
    %195 = vmatprep.subr.bf16.mxu0 0
    %196 = vmatpush1.bf16.xpose.msra.mxu0 0
    %197 = vmatprep.subr.bf16.mxu0 0
    %198 = vmatpush1.bf16.xpose.msra.mxu0 0
    %199 = vmatprep.mubr.bf16.mxu0 0
    %200 = vmatmul.mubr.bf16.gmra.mrb[0].mxu0 %v162
    %v201 = vpop.f32.mrb[0].mxu0
    %v202 = vadd.f32 %v49, %v201
    %v203 = vpop.f32.mrb[0].mxu0
    %v204 = vpop.f32.mrb[0].mxu0
    %v205 = vadd.f32 %v50, %v204
    %v206 = vpop.f32.mrb[0].mxu0
    %207 = vdwg.mxu0
    %vm208 = vcmask 130048
    %v209 = vsel %vm208, %v202, -inf
    %210 = vmax.xlane.f32.xlu0 %v209
    %v211 = vpop.xlane.xlu0 %210
    %v212 = vsel %vm208, %v205, -inf
    %213 = vmax.xlane.f32.xlu0 %v212
    %v214 = vpop.xlane.xlu0 %213
    %v215 = vsub.f32 %v202, %v211
    %v216 = vsub.f32 %v205, %v214
    %v217 = vmul.f32 %v215, 1.442695
    %v218 = vpow.pop %v217
    %v219 = vmul.f32 %v216, 1.442695
    %v220 = vpow.pop %v219
    %v221 = vsel %vm208, %v218, 0.0
    %222 = vadd.xlane.f32.xlu0 %v221
    %v223 = vpop.xlane.xlu0 %222
    %v224 = vsel %vm208, %v220, 0.0
    %225 = vadd.xlane.f32.xlu0 %v224
    %v226 = vpop.xlane.xlu0 %225
    %v227 = vrcp.pop %v223
    %v228 = vrcp.pop %v226
    %v229 = vmul.f32 %v218, %v227
    %v230 = vmul.f32 %v220, %v228
    %v231 = vpack.c.bf16 %v230, %v229
    %232 = vrot.lane.b32.xlu0 %v156, 64
    %v233 = vpop.permute.xlu0 %232
    %v236 = vsel %vm208, %v231, 0
    %238 = vmatprep.subr.bf16.mxu0 0
    %239 = vmatpush1.bf16.msra.mxu0 %v233
    %240 = vmatprep.subr.bf16.mxu0 0
    %241 = vmatpush1.bf16.msra.mxu0 0
    %242 = vmatprep.subr.bf16.mxu0 0
    %243 = vmatpush1.bf16.msra.mxu0 0
    %244 = vmatprep.subr.bf16.mxu0 0
    %245 = vmatpush1.bf16.msra.mxu0 0
    %246 = vmatprep.subr.bf16.mxu0 0
    %247 = vmatpush1.bf16.msra.mxu0 0
    %248 = vmatprep.subr.bf16.mxu0 0
    %249 = vmatpush1.bf16.msra.mxu0 0
    %250 = vmatprep.subr.bf16.mxu0 0
    %251 = vmatpush1.bf16.msra.mxu0 0
    %252 = vmatprep.subr.bf16.mxu0 0
    %253 = vmatpush1.bf16.msra.mxu0 0
    %254 = vmatprep.subr.bf16.mxu0 0
    %255 = vmatpush1.bf16.msra.mxu0 0
    %256 = vmatprep.subr.bf16.mxu0 0
    %257 = vmatpush1.bf16.msra.mxu0 0
    %258 = vmatprep.subr.bf16.mxu0 0
    %259 = vmatpush1.bf16.msra.mxu0 0
    %260 = vmatprep.subr.bf16.mxu0 0
    %261 = vmatpush1.bf16.msra.mxu0 0
    %262 = vmatprep.subr.bf16.mxu0 0
    %263 = vmatpush1.bf16.msra.mxu0 0
    %264 = vmatprep.subr.bf16.mxu0 0
    %265 = vmatpush1.bf16.msra.mxu0 0
    %266 = vmatprep.subr.bf16.mxu0 0
    %267 = vmatpush1.bf16.msra.mxu0 0
    %268 = vmatprep.subr.bf16.mxu0 0
    %269 = vmatpush1.bf16.msra.mxu0 0
    %270 = vmatprep.mubr.bf16.mxu0 0
    %271 = vmatmul.mubr.bf16.gmra.mrb[0].mxu0 %v236
    %v272 = vpop.f32.mrb[0].mxu0
    %v273 = vadd.f32 0.0, %v272
    %v274 = vpop.f32.mrb[0].mxu0
    %v275 = vpop.f32.mrb[0].mxu0
    %v276 = vadd.f32 0.0, %v275
    %v277 = vpop.f32.mrb[0].mxu0
    %278 = vdwg.mxu0
    %279 = vrot.lane.b32.xlu0 %v156, 120
    %v280 = vpop.permute.xlu0 %279
    %281 = vrot.lane.b32.xlu0 %v156, 88
    %v282 = vpop.permute.xlu0 %281
    %v284 = vsel %vm160, %v280, 0
    %v287 = vsel %vm160, %v282, 0
    %289 = vmatprep.subr.bf16.mxu0 0
    %290 = vmatpush1.bf16.xpose.msra.mxu0 %v287
    %291 = vmatprep.subr.bf16.mxu0 0
    %292 = vmatpush1.bf16.xpose.msra.mxu0 0
    %293 = vmatprep.subr.bf16.mxu0 0
    %294 = vmatpush1.bf16.xpose.msra.mxu0 0
    %295 = vmatprep.subr.bf16.mxu0 0
    %296 = vmatpush1.bf16.xpose.msra.mxu0 0
    %297 = vmatprep.subr.bf16.mxu0 0
    %298 = vmatpush1.bf16.xpose.msra.mxu0 0
    %299 = vmatprep.subr.bf16.mxu0 0
    %300 = vmatpush1.bf16.xpose.msra.mxu0 0
    %301 = vmatprep.subr.bf16.mxu0 0
    %302 = vmatpush1.bf16.xpose.msra.mxu0 0
    %303 = vmatprep.subr.bf16.mxu0 0
    %304 = vmatpush1.bf16.xpose.msra.mxu0 0
    %305 = vmatprep.subr.bf16.mxu0 0
    %306 = vmatpush1.bf16.xpose.msra.mxu0 0
    %307 = vmatprep.subr.bf16.mxu0 0
    %308 = vmatpush1.bf16.xpose.msra.mxu0 0
    %309 = vmatprep.subr.bf16.mxu0 0
    %310 = vmatpush1.bf16.xpose.msra.mxu0 0
    %311 = vmatprep.subr.bf16.mxu0 0
    %312 = vmatpush1.bf16.xpose.msra.mxu0 0
    %313 = vmatprep.subr.bf16.mxu0 0
    %314 = vmatpush1.bf16.xpose.msra.mxu0 0
    %315 = vmatprep.subr.bf16.mxu0 0
    %316 = vmatpush1.bf16.xpose.msra.mxu0 0
    %317 = vmatprep.subr.bf16.mxu0 0
    %318 = vmatpush1.bf16.xpose.msra.mxu0 0
    %319 = vmatprep.subr.bf16.mxu0 0
    %320 = vmatpush1.bf16.xpose.msra.mxu0 0
    %321 = vmatprep.mubr.bf16.mxu0 0
    %322 = vmatmul.mubr.bf16.gmra.mrb[0].mxu0 %v284
    %v323 = vpop.f32.mrb[0].mxu0
    %v324 = vadd.f32 %v49, %v323
    %v325 = vpop.f32.mrb[0].mxu0
    %v326 = vpop.f32.mrb[0].mxu0
    %v327 = vadd.f32 %v50, %v326
    %v328 = vpop.f32.mrb[0].mxu0
    %329 = vdwg.mxu0
    %v330 = vsel %vm208, %v324, -inf
    %331 = vmax.xlane.f32.xlu0 %v330
    %v332 = vpop.xlane.xlu0 %331
    %v333 = vsel %vm208, %v327, -inf
    %334 = vmax.xlane.f32.xlu0 %v333
    %v335 = vpop.xlane.xlu0 %334
    %v336 = vsub.f32 %v324, %v332
    %v337 = vsub.f32 %v327, %v335
    %v338 = vmul.f32 %v336, 1.442695
    %v339 = vpow.pop %v338
    %v340 = vmul.f32 %v337, 1.442695
    %v341 = vpow.pop %v340
    %v342 = vsel %vm208, %v339, 0.0
    %343 = vadd.xlane.f32.xlu0 %v342
    %v344 = vpop.xlane.xlu0 %343
    %v345 = vsel %vm208, %v341, 0.0
    %346 = vadd.xlane.f32.xlu0 %v345
    %v347 = vpop.xlane.xlu0 %346
    %v348 = vrcp.pop %v344
    %v349 = vrcp.pop %v347
    %v350 = vmul.f32 %v339, %v348
    %v351 = vmul.f32 %v341, %v349
    %v352 = vpack.c.bf16 %v351, %v350
    %353 = vrot.lane.b32.xlu0 %v156, 56
    %v354 = vpop.permute.xlu0 %353
    %v357 = vsel %vm208, %v352, 0
    %359 = vmatprep.subr.bf16.mxu0 0
    %360 = vmatpush1.bf16.msra.mxu0 %v354
    %361 = vmatprep.subr.bf16.mxu0 0
    %362 = vmatpush1.bf16.msra.mxu0 0
    %363 = vmatprep.subr.bf16.mxu0 0
    %364 = vmatpush1.bf16.msra.mxu0 0
    %365 = vmatprep.subr.bf16.mxu0 0
    %366 = vmatpush1.bf16.msra.mxu0 0
    %367 = vmatprep.subr.bf16.mxu0 0
    %368 = vmatpush1.bf16.msra.mxu0 0
    %369 = vmatprep.subr.bf16.mxu0 0
    %370 = vmatpush1.bf16.msra.mxu0 0
    %371 = vmatprep.subr.bf16.mxu0 0
    %372 = vmatpush1.bf16.msra.mxu0 0
    %373 = vmatprep.subr.bf16.mxu0 0
    %374 = vmatpush1.bf16.msra.mxu0 0
    %375 = vmatprep.subr.bf16.mxu0 0
    %376 = vmatpush1.bf16.msra.mxu0 0
    %377 = vmatprep.subr.bf16.mxu0 0
    %378 = vmatpush1.bf16.msra.mxu0 0
    %379 = vmatprep.subr.bf16.mxu0 0
    %380 = vmatpush1.bf16.msra.mxu0 0
    %381 = vmatprep.subr.bf16.mxu0 0
    %382 = vmatpush1.bf16.msra.mxu0 0
    %383 = vmatprep.subr.bf16.mxu0 0
    %384 = vmatpush1.bf16.msra.mxu0 0
    %385 = vmatprep.subr.bf16.mxu0 0
    %386 = vmatpush1.bf16.msra.mxu0 0
    %387 = vmatprep.subr.bf16.mxu0 0
    %388 = vmatpush1.bf16.msra.mxu0 0
    %389 = vmatprep.subr.bf16.mxu0 0
    %390 = vmatpush1.bf16.msra.mxu0 0
    %391 = vmatprep.mubr.bf16.mxu0 0
    %392 = vmatmul.mubr.bf16.gmra.mrb[0].mxu0 %v357
    %v393 = vpop.f32.mrb[0].mxu0
    %v394 = vadd.f32 0.0, %v393
    %v395 = vpop.f32.mrb[0].mxu0
    %v396 = vpop.f32.mrb[0].mxu0
    %v397 = vadd.f32 0.0, %v396
    %v398 = vpop.f32.mrb[0].mxu0
    %399 = vdwg.mxu0
    %400 = vrot.lane.b32.xlu0 %v156, 112
    %v401 = vpop.permute.xlu0 %400
    %402 = vrot.lane.b32.xlu0 %v156, 80
    %v403 = vpop.permute.xlu0 %402
    %v405 = vsel %vm160, %v401, 0
    %v408 = vsel %vm160, %v403, 0
    %410 = vmatprep.subr.bf16.mxu0 0
    %411 = vmatpush1.bf16.xpose.msra.mxu0 %v408
    %412 = vmatprep.subr.bf16.mxu0 0
    %413 = vmatpush1.bf16.xpose.msra.mxu0 0
    %414 = vmatprep.subr.bf16.mxu0 0
    %415 = vmatpush1.bf16.xpose.msra.mxu0 0
    %416 = vmatprep.subr.bf16.mxu0 0
    %417 = vmatpush1.bf16.xpose.msra.mxu0 0
    %418 = vmatprep.subr.bf16.mxu0 0
    %419 = vmatpush1.bf16.xpose.msra.mxu0 0
    %420 = vmatprep.subr.bf16.mxu0 0
    %421 = vmatpush1.bf16.xpose.msra.mxu0 0
    %422 = vmatprep.subr.bf16.mxu0 0
    %423 = vmatpush1.bf16.xpose.msra.mxu0 0
    %424 = vmatprep.subr.bf16.mxu0 0
    %425 = vmatpush1.bf16.xpose.msra.mxu0 0
    %426 = vmatprep.subr.bf16.mxu0 0
    %427 = vmatpush1.bf16.xpose.msra.mxu0 0
    %428 = vmatprep.subr.bf16.mxu0 0
    %429 = vmatpush1.bf16.xpose.msra.mxu0 0
    %430 = vmatprep.subr.bf16.mxu0 0
    %431 = vmatpush1.bf16.xpose.msra.mxu0 0
    %432 = vmatprep.subr.bf16.mxu0 0
    %433 = vmatpush1.bf16.xpose.msra.mxu0 0
    %434 = vmatprep.subr.bf16.mxu0 0
    %435 = vmatpush1.bf16.xpose.msra.mxu0 0
    %436 = vmatprep.subr.bf16.mxu0 0
    %437 = vmatpush1.bf16.xpose.msra.mxu0 0
    %438 = vmatprep.subr.bf16.mxu0 0
    %439 = vmatpush1.bf16.xpose.msra.mxu0 0
    %440 = vmatprep.subr.bf16.mxu0 0
    %441 = vmatpush1.bf16.xpose.msra.mxu0 0
    %442 = vmatprep.mubr.bf16.mxu0 0
    %443 = vmatmul.mubr.bf16.gmra.mrb[0].mxu0 %v405
    %v444 = vpop.f32.mrb[0].mxu0
    %v445 = vadd.f32 %v49, %v444
    %v446 = vpop.f32.mrb[0].mxu0
    %v447 = vpop.f32.mrb[0].mxu0
    %v448 = vadd.f32 %v50, %v447
    %v449 = vpop.f32.mrb[0].mxu0
    %450 = vdwg.mxu0
    %v451 = vsel %vm208, %v445, -inf
    %452 = vmax.xlane.f32.xlu0 %v451
    %v453 = vpop.xlane.xlu0 %452
    %v454 = vsel %vm208, %v448, -inf
    %455 = vmax.xlane.f32.xlu0 %v454
    %v456 = vpop.xlane.xlu0 %455
    %v457 = vsub.f32 %v445, %v453
    %v458 = vsub.f32 %v448, %v456
    %v459 = vmul.f32 %v457, 1.442695
    %v460 = vpow.pop %v459
    %v461 = vmul.f32 %v458, 1.442695
    %v462 = vpow.pop %v461
    %v463 = vsel %vm208, %v460, 0.0
    %464 = vadd.xlane.f32.xlu0 %v463
    %v465 = vpop.xlane.xlu0 %464
    %v466 = vsel %vm208, %v462, 0.0
    %467 = vadd.xlane.f32.xlu0 %v466
    %v468 = vpop.xlane.xlu0 %467
    %v469 = vrcp.pop %v465
    %v470 = vrcp.pop %v468
    %v471 = vmul.f32 %v460, %v469
    %v472 = vmul.f32 %v462, %v470
    %v473 = vpack.c.bf16 %v472, %v471
    %474 = vrot.lane.b32.xlu0 %v156, 48
    %v475 = vpop.permute.xlu0 %474
    %v478 = vsel %vm208, %v473, 0
    %480 = vmatprep.subr.bf16.mxu0 0
    %481 = vmatpush1.bf16.msra.mxu0 %v475
    %482 = vmatprep.subr.bf16.mxu0 0
    %483 = vmatpush1.bf16.msra.mxu0 0
    %484 = vmatprep.subr.bf16.mxu0 0
    %485 = vmatpush1.bf16.msra.mxu0 0
    %486 = vmatprep.subr.bf16.mxu0 0
    %487 = vmatpush1.bf16.msra.mxu0 0
    %488 = vmatprep.subr.bf16.mxu0 0
    %489 = vmatpush1.bf16.msra.mxu0 0
    %490 = vmatprep.subr.bf16.mxu0 0
    %491 = vmatpush1.bf16.msra.mxu0 0
    %492 = vmatprep.subr.bf16.mxu0 0
    %493 = vmatpush1.bf16.msra.mxu0 0
    %494 = vmatprep.subr.bf16.mxu0 0
    %495 = vmatpush1.bf16.msra.mxu0 0
    %496 = vmatprep.subr.bf16.mxu0 0
    %497 = vmatpush1.bf16.msra.mxu0 0
    %498 = vmatprep.subr.bf16.mxu0 0
    %499 = vmatpush1.bf16.msra.mxu0 0
    %500 = vmatprep.subr.bf16.mxu0 0
    %501 = vmatpush1.bf16.msra.mxu0 0
    %502 = vmatprep.subr.bf16.mxu0 0
    %503 = vmatpush1.bf16.msra.mxu0 0
    %504 = vmatprep.subr.bf16.mxu0 0
    %505 = vmatpush1.bf16.msra.mxu0 0
    %506 = vmatprep.subr.bf16.mxu0 0
    %507 = vmatpush1.bf16.msra.mxu0 0
    %508 = vmatprep.subr.bf16.mxu0 0
    %509 = vmatpush1.bf16.msra.mxu0 0
    %510 = vmatprep.subr.bf16.mxu0 0
    %511 = vmatpush1.bf16.msra.mxu0 0
    %512 = vmatprep.mubr.bf16.mxu0 0
    %513 = vmatmul.mubr.bf16.gmra.mrb[0].mxu0 %v478
    %v514 = vpop.f32.mrb[0].mxu0
    %v515 = vadd.f32 0.0, %v514
    %v516 = vpop.f32.mrb[0].mxu0
    %v517 = vpop.f32.mrb[0].mxu0
    %v518 = vadd.f32 0.0, %v517
    %v519 = vpop.f32.mrb[0].mxu0
    %520 = vdwg.mxu0
    %521 = vrot.lane.b32.xlu0 %v156, 104
    %v522 = vpop.permute.xlu0 %521
    %523 = vrot.lane.b32.xlu0 %v156, 72
    %v524 = vpop.permute.xlu0 %523
    %v526 = vsel %vm160, %v522, 0
    %v529 = vsel %vm160, %v524, 0
    %531 = vmatprep.subr.bf16.mxu0 0
    %532 = vmatpush1.bf16.xpose.msra.mxu0 %v529
    %533 = vmatprep.subr.bf16.mxu0 0
    %534 = vmatpush1.bf16.xpose.msra.mxu0 0
    %535 = vmatprep.subr.bf16.mxu0 0
    %536 = vmatpush1.bf16.xpose.msra.mxu0 0
    %537 = vmatprep.subr.bf16.mxu0 0
    %538 = vmatpush1.bf16.xpose.msra.mxu0 0
    %539 = vmatprep.subr.bf16.mxu0 0
    %540 = vmatpush1.bf16.xpose.msra.mxu0 0
    %541 = vmatprep.subr.bf16.mxu0 0
    %542 = vmatpush1.bf16.xpose.msra.mxu0 0
    %543 = vmatprep.subr.bf16.mxu0 0
    %544 = vmatpush1.bf16.xpose.msra.mxu0 0
    %545 = vmatprep.subr.bf16.mxu0 0
    %546 = vmatpush1.bf16.xpose.msra.mxu0 0
    %547 = vmatprep.subr.bf16.mxu0 0
    %548 = vmatpush1.bf16.xpose.msra.mxu0 0
    %549 = vmatprep.subr.bf16.mxu0 0
    %550 = vmatpush1.bf16.xpose.msra.mxu0 0
    %551 = vmatprep.subr.bf16.mxu0 0
    %552 = vmatpush1.bf16.xpose.msra.mxu0 0
    %553 = vmatprep.subr.bf16.mxu0 0
    %554 = vmatpush1.bf16.xpose.msra.mxu0 0
    %555 = vmatprep.subr.bf16.mxu0 0
    %556 = vmatpush1.bf16.xpose.msra.mxu0 0
    %557 = vmatprep.subr.bf16.mxu0 0
    %558 = vmatpush1.bf16.xpose.msra.mxu0 0
    %559 = vmatprep.subr.bf16.mxu0 0
    %560 = vmatpush1.bf16.xpose.msra.mxu0 0
    %561 = vmatprep.subr.bf16.mxu0 0
    %562 = vmatpush1.bf16.xpose.msra.mxu0 0
    %563 = vmatprep.mubr.bf16.mxu0 0
    %564 = vmatmul.mubr.bf16.gmra.mrb[0].mxu0 %v526
    %v565 = vpop.f32.mrb[0].mxu0
    %v566 = vadd.f32 %v49, %v565
    %v567 = vpop.f32.mrb[0].mxu0
    %v568 = vpop.f32.mrb[0].mxu0
    %v569 = vadd.f32 %v50, %v568
    %v570 = vpop.f32.mrb[0].mxu0
    %571 = vdwg.mxu0
    %v572 = vsel %vm208, %v566, -inf
    %573 = vmax.xlane.f32.xlu0 %v572
    %v574 = vpop.xlane.xlu0 %573
    %v575 = vsel %vm208, %v569, -inf
    %576 = vmax.xlane.f32.xlu0 %v575
    %v577 = vpop.xlane.xlu0 %576
    %v578 = vsub.f32 %v566, %v574
    %v579 = vsub.f32 %v569, %v577
    %v580 = vmul.f32 %v578, 1.442695
    %v581 = vpow.pop %v580
    %v582 = vmul.f32 %v579, 1.442695
    %v583 = vpow.pop %v582
    %v584 = vsel %vm208, %v581, 0.0
    %585 = vadd.xlane.f32.xlu0 %v584
    %v586 = vpop.xlane.xlu0 %585
    %v587 = vsel %vm208, %v583, 0.0
    %588 = vadd.xlane.f32.xlu0 %v587
    %v589 = vpop.xlane.xlu0 %588
    %v590 = vrcp.pop %v586
    %v591 = vrcp.pop %v589
    %v592 = vmul.f32 %v581, %v590
    %v593 = vmul.f32 %v583, %v591
    %v594 = vpack.c.bf16 %v593, %v592
    %595 = vrot.lane.b32.xlu0 %v156, 40
    %v596 = vpop.permute.xlu0 %595
    %v599 = vsel %vm208, %v594, 0
    %601 = vmatprep.subr.bf16.mxu0 0
    %602 = vmatpush1.bf16.msra.mxu0 %v596
    %603 = vmatprep.subr.bf16.mxu0 0
    %604 = vmatpush1.bf16.msra.mxu0 0
    %605 = vmatprep.subr.bf16.mxu0 0
    %606 = vmatpush1.bf16.msra.mxu0 0
    %607 = vmatprep.subr.bf16.mxu0 0
    %608 = vmatpush1.bf16.msra.mxu0 0
    %609 = vmatprep.subr.bf16.mxu0 0
    %610 = vmatpush1.bf16.msra.mxu0 0
    %611 = vmatprep.subr.bf16.mxu0 0
    %612 = vmatpush1.bf16.msra.mxu0 0
    %613 = vmatprep.subr.bf16.mxu0 0
    %614 = vmatpush1.bf16.msra.mxu0 0
    %615 = vmatprep.subr.bf16.mxu0 0
    %616 = vmatpush1.bf16.msra.mxu0 0
    %617 = vmatprep.subr.bf16.mxu0 0
    %618 = vmatpush1.bf16.msra.mxu0 0
    %619 = vmatprep.subr.bf16.mxu0 0
    %620 = vmatpush1.bf16.msra.mxu0 0
    %621 = vmatprep.subr.bf16.mxu0 0
    %622 = vmatpush1.bf16.msra.mxu0 0
    %623 = vmatprep.subr.bf16.mxu0 0
    %624 = vmatpush1.bf16.msra.mxu0 0
    %625 = vmatprep.subr.bf16.mxu0 0
    %626 = vmatpush1.bf16.msra.mxu0 0
    %627 = vmatprep.subr.bf16.mxu0 0
    %628 = vmatpush1.bf16.msra.mxu0 0
    %629 = vmatprep.subr.bf16.mxu0 0
    %630 = vmatpush1.bf16.msra.mxu0 0
    %631 = vmatprep.subr.bf16.mxu0 0
    %632 = vmatpush1.bf16.msra.mxu0 0
    %633 = vmatprep.mubr.bf16.mxu0 0
    %634 = vmatmul.mubr.bf16.gmra.mrb[0].mxu0 %v599
    %v635 = vpop.f32.mrb[0].mxu0
    %v636 = vadd.f32 0.0, %v635
    %v637 = vpop.f32.mrb[0].mxu0
    %v638 = vpop.f32.mrb[0].mxu0
    %v639 = vadd.f32 0.0, %v638
    %v640 = vpop.f32.mrb[0].mxu0
    %641 = vdwg.mxu0
    %644 = vrot.lane.b32.xlu0 %v394, 8
    %v645 = vpop.permute.xlu0 %644
    %646 = vrot.lane.b32.xlu0 %v397, 8
    %v647 = vpop.permute.xlu0 %646
    %652 = vrot.lane.b32.xlu0 %v515, 16
    %v653 = vpop.permute.xlu0 %652
    %654 = vrot.lane.b32.xlu0 %v518, 16
    %v655 = vpop.permute.xlu0 %654
    %660 = vrot.lane.b32.xlu0 %v636, 24
    %v661 = vpop.permute.xlu0 %660
    %662 = vrot.lane.b32.xlu0 %v639, 24
    %v663 = vpop.permute.xlu0 %662
    %v666 = vsel %vm160, %v273, %v645
    %v667 = vsel %vm160, %v276, %v647
    %v668 = vsel %vm208, %v666, %v653
    %v669 = vsel %vm208, %v667, %v655
    %vm670 = vcmask 195584
    %v671 = vsel %vm670, %v668, %v661
    %v672 = vsel %vm670, %v669, %v663
    %v673 = vpack.c.bf16 %v672, %v671
    %v674 = vld [vmem:[%s3] sm:$0xf]
    %v675 = vld [vmem:[%s3 + $0x4] sm:$0xf]
    %v676 = vld [vmem:[%s3 + $0x8] sm:$0xf]
    %v677 = vld [vmem:[%s3 + $0xc] sm:$0xf]
    %v678 = vlaneseq
    %v679 = vshrl.u32 %v678, 7
    %v680 = vsub.s32 0, %v679
    %v681 = vrot.slane %v45, %v680
    %v686 = vunpack.c.l.b16 %v674
    %v687 = vunpack.c.l.b16 %v675
    %v688 = vunpack.c.l.b16 %v676
    %v689 = vunpack.c.l.b16 %v677
    %v690 = vpack.c.b16 %v687, %v686
    %v691 = vpack.c.b16 %v689, %v688
    %v695 = vsel %vm51, %v673, 0
    %697 = vmatprep.subr.bf16.mxu0 0
    %698 = vmatpush1.bf16.msra.mxu0 %v690
    %699 = vmatprep.subr.bf16.mxu0 0
    %700 = vmatpush1.bf16.msra.mxu0 %v691
    %701 = vmatprep.subr.bf16.mxu0 0
    %702 = vmatpush1.bf16.msra.mxu0 0
    %703 = vmatprep.subr.bf16.mxu0 0
    %704 = vmatpush1.bf16.msra.mxu0 0
    %705 = vmatprep.subr.bf16.mxu0 0
    %706 = vmatpush1.bf16.msra.mxu0 0
    %707 = vmatprep.subr.bf16.mxu0 0
    %708 = vmatpush1.bf16.msra.mxu0 0
    %709 = vmatprep.subr.bf16.mxu0 0
    %710 = vmatpush1.bf16.msra.mxu0 0
    %711 = vmatprep.subr.bf16.mxu0 0
    %712 = vmatpush1.bf16.msra.mxu0 0
    %713 = vmatprep.subr.bf16.mxu0 0
    %714 = vmatpush1.bf16.msra.mxu0 0
    %715 = vmatprep.subr.bf16.mxu0 0
    %716 = vmatpush1.bf16.msra.mxu0 0
    %717 = vmatprep.subr.bf16.mxu0 0
    %718 = vmatpush1.bf16.msra.mxu0 0
    %719 = vmatprep.subr.bf16.mxu0 0
    %720 = vmatpush1.bf16.msra.mxu0 0
    %721 = vmatprep.subr.bf16.mxu0 0
    %722 = vmatpush1.bf16.msra.mxu0 0
    %723 = vmatprep.subr.bf16.mxu0 0
    %724 = vmatpush1.bf16.msra.mxu0 0
    %725 = vmatprep.subr.bf16.mxu0 0
    %726 = vmatpush1.bf16.msra.mxu0 0
    %727 = vmatprep.subr.bf16.mxu0 0
    %728 = vmatpush1.bf16.msra.mxu0 0
    %729 = vmatprep.mubr.bf16.mxu0 0
    %730 = vmatmul.mubr.bf16.gmra.mrb[0].mxu0 %v695
    %v731 = vpop.f32.mrb[0].mxu0
    %v732 = vadd.f32 %v681, %v731
    %v733 = vpop.f32.mrb[0].mxu0
    %v734 = vpop.f32.mrb[0].mxu0
    %v735 = vadd.f32 %v681, %v734
    %v736 = vpop.f32.mrb[0].mxu0
    %737 = vdwg.mxu0
    %v738 = vadd.f32 %v732, %v39
    %v739 = vadd.f32 %v735, %v40
    %v740 = vsel %vm51, %v738, 0.0
    %741 = vadd.xlane.f32.xlu0 %v740
    %v742 = vpop.xlane.xlu0 %741
    %v743 = vsel %vm51, %v739, 0.0
    %744 = vadd.xlane.f32.xlu0 %v743
    %v745 = vpop.xlane.xlu0 %744
    %v746 = vmul.f32 %v742, %v58
    %v747 = vmul.f32 %v745, %v58
    %v748 = vsub.f32 %v738, %v746
    %v749 = vsub.f32 %v739, %v747
    %v750 = vmul.f32 %v748, %v748
    %v751 = vmul.f32 %v749, %v749
    %v752 = vsel %vm51, %v750, 0.0
    %753 = vadd.xlane.f32.xlu0 %v752
    %v754 = vpop.xlane.xlu0 %753
    %v755 = vsel %vm51, %v751, 0.0
    %756 = vadd.xlane.f32.xlu0 %v755
    %v757 = vpop.xlane.xlu0 %756
    %v758 = vmul.f32 %v754, %v58
    %v759 = vmul.f32 %v757, %v58
    %v760 = vadd.f32 %v758, 1e-05
    %v761 = vadd.f32 %v759, 1e-05
    %v762 = vrsqrt.pop %v760
    %v763 = vrsqrt.pop %v761
    %v764 = vmul.f32 %v748, %v762
    %v765 = vmul.f32 %v749, %v763
    %v766 = vlaneseq
    %v767 = vshrl.u32 %v766, 7
    %v768 = vsub.s32 0, %v767
    %v769 = vrot.slane %v43, %v768
    %v770 = vmul.f32 %v764, %v769
    %v771 = vmul.f32 %v765, %v769
    %v772 = vlaneseq
    %v773 = vshrl.u32 %v772, 7
    %v774 = vsub.s32 0, %v773
    %v775 = vrot.slane %v44, %v774
    %v776 = vadd.f32 %v770, %v775
    %v777 = vadd.f32 %v771, %v775
    %v778 = vpack.c.bf16 %v777, %v776
    %v779 = vld [vmem:[%s4] sm:$0xf]
    %v780 = vld [vmem:[%s4 + $0x4] sm:$0xf]
    %v781 = vld [vmem:[%s4 + $0x8] sm:$0xf]
    %v782 = vld [vmem:[%s4 + $0xc] sm:$0xf]
    %v783 = vlaneseq
    %v784 = vshrl.u32 %v783, 7
    %v785 = vsub.s32 0, %v784
    %v786 = vrot.slane %v47, %v785
    %v791 = vunpack.c.l.b16 %v779
    %v792 = vunpack.c.l.b16 %v780
    %v793 = vunpack.c.l.b16 %v781
    %v794 = vunpack.c.l.b16 %v782
    %v795 = vpack.c.b16 %v792, %v791
    %v796 = vpack.c.b16 %v794, %v793
    %v800 = vsel %vm51, %v778, 0
    %802 = vmatprep.subr.bf16.mxu0 0
    %803 = vmatpush1.bf16.msra.mxu0 %v795
    %804 = vmatprep.subr.bf16.mxu0 0
    %805 = vmatpush1.bf16.msra.mxu0 %v796
    %806 = vmatprep.subr.bf16.mxu0 0
    %807 = vmatpush1.bf16.msra.mxu0 0
    %808 = vmatprep.subr.bf16.mxu0 0
    %809 = vmatpush1.bf16.msra.mxu0 0
    %810 = vmatprep.subr.bf16.mxu0 0
    %811 = vmatpush1.bf16.msra.mxu0 0
    %812 = vmatprep.subr.bf16.mxu0 0
    %813 = vmatpush1.bf16.msra.mxu0 0
    %814 = vmatprep.subr.bf16.mxu0 0
    %815 = vmatpush1.bf16.msra.mxu0 0
    %816 = vmatprep.subr.bf16.mxu0 0
    %817 = vmatpush1.bf16.msra.mxu0 0
    %818 = vmatprep.subr.bf16.mxu0 0
    %819 = vmatpush1.bf16.msra.mxu0 0
    %820 = vmatprep.subr.bf16.mxu0 0
    %821 = vmatpush1.bf16.msra.mxu0 0
    %822 = vmatprep.subr.bf16.mxu0 0
    %823 = vmatpush1.bf16.msra.mxu0 0
    %824 = vmatprep.subr.bf16.mxu0 0
    %825 = vmatpush1.bf16.msra.mxu0 0
    %826 = vmatprep.subr.bf16.mxu0 0
    %827 = vmatpush1.bf16.msra.mxu0 0
    %828 = vmatprep.subr.bf16.mxu0 0
    %829 = vmatpush1.bf16.msra.mxu0 0
    %830 = vmatprep.subr.bf16.mxu0 0
    %831 = vmatpush1.bf16.msra.mxu0 0
    %832 = vmatprep.subr.bf16.mxu0 0
    %833 = vmatpush1.bf16.msra.mxu0 0
    %834 = vmatprep.mubr.bf16.mxu0 0
    %835 = vmatmul.mubr.bf16.gmra.mrb[0].mxu0 %v800
    %v836 = vpop.f32.mrb[0].mxu0
    %v837 = vadd.f32 %v786, %v836
    %v838 = vpop.f32.mrb[0].mxu0
    %v839 = vpop.f32.mrb[0].mxu0
    %v840 = vadd.f32 %v786, %v839
    %v841 = vpop.f32.mrb[0].mxu0
    %842 = vdwg.mxu0
    %v843 = vmul.f32 %v837, %v837
    %v844 = vmul.f32 %v840, %v840
    %v845 = vmul.f32 %v837, %v843
    %v846 = vmul.f32 %v840, %v844
    %v847 = vmul.f32 %v845, 0.044715
    %v848 = vmul.f32 %v846, 0.044715
    %v849 = vadd.f32 %v837, %v847
    %v850 = vadd.f32 %v840, %v848
    %v851 = vmul.f32 %v849, 0.7978846
    %v852 = vmul.f32 %v850, 0.7978846
    %v853 = vtanh.pop %v851
    %v854 = vtanh.pop %v852
    %v855 = vadd.f32 %v853, 1.0
    %v856 = vadd.f32 %v854, 1.0
    %v857 = vmul.f32 %v855, 0.5
    %v858 = vmul.f32 %v856, 0.5
    %v859 = vmul.f32 %v837, %v857
    %v860 = vmul.f32 %v840, %v858
    %v861 = vpack.c.bf16 %v860, %v859
    %v862 = vld [vmem:[%s5] sm:$0xf]
    %v863 = vld [vmem:[%s5 + $0x4] sm:$0xf]
    %v864 = vld [vmem:[%s5 + $0x8] sm:$0xf]
    %v865 = vld [vmem:[%s5 + $0xc] sm:$0xf]
    %v866 = vld [vmem:[%s5 + $0x10] sm:$0xf]
    %v867 = vld [vmem:[%s5 + $0x14] sm:$0xf]
    %v868 = vld [vmem:[%s5 + $0x18] sm:$0xf]
    %v869 = vld [vmem:[%s5 + $0x1c] sm:$0xf]
    %v870 = vld [vmem:[%s5 + $0x20] sm:$0xf]
    %v871 = vld [vmem:[%s5 + $0x24] sm:$0xf]
    %v872 = vld [vmem:[%s5 + $0x28] sm:$0xf]
    %v873 = vld [vmem:[%s5 + $0x2c] sm:$0xf]
    %v874 = vld [vmem:[%s5 + $0x30] sm:$0xf]
    %v875 = vld [vmem:[%s5 + $0x34] sm:$0xf]
    %v876 = vld [vmem:[%s5 + $0x38] sm:$0xf]
    %v877 = vld [vmem:[%s5 + $0x3c] sm:$0xf]
    %v878 = vlaneseq
    %v879 = vshrl.u32 %v878, 7
    %v880 = vsub.s32 0, %v879
    %v881 = vrot.slane %v46, %v880
    %v898 = vunpack.c.l.b16 %v862
    %v899 = vunpack.c.l.b16 %v863
    %v900 = vunpack.c.l.b16 %v864
    %v901 = vunpack.c.l.b16 %v865
    %v902 = vunpack.c.l.b16 %v866
    %v903 = vunpack.c.l.b16 %v867
    %v904 = vunpack.c.l.b16 %v868
    %v905 = vunpack.c.l.b16 %v869
    %v906 = vunpack.c.l.b16 %v870
    %v907 = vunpack.c.l.b16 %v871
    %v908 = vunpack.c.l.b16 %v872
    %v909 = vunpack.c.l.b16 %v873
    %v910 = vunpack.c.l.b16 %v874
    %v911 = vunpack.c.l.b16 %v875
    %v912 = vunpack.c.l.b16 %v876
    %v913 = vunpack.c.l.b16 %v877
    %v914 = vpack.c.b16 %v899, %v898
    %v915 = vpack.c.b16 %v901, %v900
    %v916 = vpack.c.b16 %v903, %v902
    %v917 = vpack.c.b16 %v905, %v904
    %v918 = vpack.c.b16 %v907, %v906
    %v919 = vpack.c.b16 %v909, %v908
    %v920 = vpack.c.b16 %v911, %v910
    %v921 = vpack.c.b16 %v913, %v912
    %930 = vmatprep.subr.bf16.mxu0 0
    %931 = vmatpush1.bf16.msra.mxu0 %v914
    %932 = vmatprep.subr.bf16.mxu0 0
    %933 = vmatpush1.bf16.msra.mxu0 %v915
    %934 = vmatprep.subr.bf16.mxu0 0
    %935 = vmatpush1.bf16.msra.mxu0 %v916
    %936 = vmatprep.subr.bf16.mxu0 0
    %937 = vmatpush1.bf16.msra.mxu0 %v917
    %938 = vmatprep.subr.bf16.mxu0 0
    %939 = vmatpush1.bf16.msra.mxu0 %v918
    %940 = vmatprep.subr.bf16.mxu0 0
    %941 = vmatpush1.bf16.msra.mxu0 %v919
    %942 = vmatprep.subr.bf16.mxu0 0
    %943 = vmatpush1.bf16.msra.mxu0 %v920
    %944 = vmatprep.subr.bf16.mxu0 0
    %945 = vmatpush1.bf16.msra.mxu0 %v921
    %946 = vmatprep.subr.bf16.mxu0 0
    %947 = vmatpush1.bf16.msra.mxu0 0
    %948 = vmatprep.subr.bf16.mxu0 0
    %949 = vmatpush1.bf16.msra.mxu0 0
    %950 = vmatprep.subr.bf16.mxu0 0
    %951 = vmatpush1.bf16.msra.mxu0 0
    %952 = vmatprep.subr.bf16.mxu0 0
    %953 = vmatpush1.bf16.msra.mxu0 0
    %954 = vmatprep.subr.bf16.mxu0 0
    %955 = vmatpush1.bf16.msra.mxu0 0
    %956 = vmatprep.subr.bf16.mxu0 0
    %957 = vmatpush1.bf16.msra.mxu0 0
    %958 = vmatprep.subr.bf16.mxu0 0
    %959 = vmatpush1.bf16.msra.mxu0 0
    %960 = vmatprep.subr.bf16.mxu0 0
    %961 = vmatpush1.bf16.msra.mxu0 0
    %962 = vmatprep.mubr.bf16.mxu0 0
    %963 = vmatmul.mubr.bf16.gmra.mrb[0].mxu0 %v861
    %v964 = vpop.f32.mrb[0].mxu0
    %v965 = vadd.f32 %v881, %v964
    %v966 = vpop.f32.mrb[0].mxu0
    %v967 = vpop.f32.mrb[0].mxu0
    %v968 = vadd.f32 %v881, %v967
    %v969 = vpop.f32.mrb[0].mxu0
    %970 = vdwg.mxu0
    %v971 = vadd.f32 %v965, %v738
    %v972 = vadd.f32 %v968, %v739
    %973 = vst.msk [vmem:[#allocation5] sm:$0xff] %vm51, %v971
    %974 = vst.msk [vmem:[#allocation5 + $0x8] sm:$0xff] %vm51, %v972
    // Predicated region
    $region30: #{tpu_custom_call.1} parent=1 // pred_check
      _
    $region31: #{tpu_custom_call.1} parent=1 // pred_check_branch
      %976 = sbr.rel (0) target = $region33
    $region32: #{tpu_custom_call.1} parent=1 // pred_region
      %s978 = ssub.s32 256, 256
      %979 = vsyncadd [#allocation4], %s978
      %s980 = sshll.u32 [#allocation5], 4
      %s981 = int_to_ptr.vmem [resolvable:$true] %s980
      %986 = dma.vmem_to_hbm [thread:$0]  %s981, 256, %s6, [#allocation4], 128, 128, 8
    $region33: #{tpu_custom_call.1} parent=1 // pred_fallthru
      _
    // Predicated region
    $region34: #{tpu_custom_call.1} parent=1 // pred_check
      _
    $region35: #{tpu_custom_call.1} parent=1 // pred_check_branch
      %988 = sbr.rel (0) target = $region37
    $region36: #{tpu_custom_call.1} parent=1 // pred_region
      %989 = dma.done [#allocation4], 256
    $region37: #{tpu_custom_call.1} parent=1 // pred_fallthru
      _
    %990 = vsyncpa [#allocation3], 1
    %991 = vsyncpa [#allocation4], 1

</llo_original>
